<compile_context>
chip_gen: v7x
topology: tpu7x:2x2x1
jax: 0.10.0
libtpu: 0.0.40
codegen_flags: <defaults>
</compile_context>

<pallas_src>
import jax
import jax.numpy as jnp
from jax.experimental import pallas as pl
from jax.experimental.pallas import tpu as pltpu

IN_FEATURES = 30
OUT_FEATURES = 1


def linear_kernel(x_ref, w_ref, o_ref):
    # x_ref: (TB, 30) VMEM, w_ref: (1, 30) VMEM (resident), o_ref: (TB, 1) VMEM
    prod = x_ref[...] * w_ref[...]                       # VPU, weight row broadcast over TB rows
    o_ref[...] = jnp.sum(prod, axis=1, keepdims=True)    # XLU cross-lane reduce -> (TB, 1)


def model_forward(x, weight, *, tb=4096, min_kernel_rows=2048):
    """Equivalent of Model.forward: x @ weight.T (no bias).

    x:      (B, 30) float32
    weight: (1, 30) float32  (PyTorch nn.Linear(30, 1, bias=False).weight)
    returns (B, 1)  float32
    """
    B = x.shape[0]

    # For tiny batches the fused XLA matvec beats any kernel launch.
    if B < min_kernel_rows:
        return x @ weight.T

    # Tile the batch (sublane) axis.  tb is a multiple of 128; for B <= tb a
    # single full-array block is used (always satisfies the (8,128) rule).
    block_b = tb if B > tb else B
    grid = (pl.cdiv(B, block_b),)

    out = pl.pallas_call(
        linear_kernel,
        out_shape=jax.ShapeDtypeStruct((B, OUT_FEATURES), x.dtype),
        grid_spec=pltpu.PrefetchScalarGridSpec(
            num_scalar_prefetch=0,
            grid=grid,
            in_specs=[
                # x tile in native layout: (block_b, 30).  Last dim == full dim,
                # block_b is a multiple of 128 (or the full batch) -> (8,128) ok.
                pl.BlockSpec((block_b, IN_FEATURES), lambda i: (i, 0)),
                # Weight stays resident: constant block index -> no per-step DMA.
                pl.BlockSpec((OUT_FEATURES, IN_FEATURES), lambda i: (0, 0)),
            ],
            # (block_b, 1) stores are lane-masked, but output is ~3% of total
            # HBM traffic, so this is noise compared to the saved transpose.
            out_specs=pl.BlockSpec((block_b, OUT_FEATURES), lambda i: (i, 0)),
        ),
        compiler_params=pltpu.CompilerParams(
            # Batch tiles are independent -> megacore-shardable on v7x.
            dimension_semantics=("parallel",)
        ),
    )(x, weight)

    return out


if __name__ == "__main__":
    key = jax.random.PRNGKey(0)
    kw, k1, k2, k3, k4 = jax.random.split(key, 5)

    # Deterministic parameter init mimicking nn.Linear's
    # uniform(-1/sqrt(fan_in), +1/sqrt(fan_in)).
    bound = 1.0 / jnp.sqrt(jnp.float32(IN_FEATURES))
    weight = jax.random.uniform(
        kw, (OUT_FEATURES, IN_FEATURES), dtype=jnp.float32,
        minval=-bound, maxval=bound,
    )

    # 1) Tiny batch: XLA fallback path.
    B = 8
    x = jax.random.normal(k1, (B, IN_FEATURES), dtype=jnp.float32)
    out = jax.block_until_ready(model_forward(x, weight))
    ref = x @ weight.T
    assert out.shape == (B, OUT_FEATURES), out.shape
    assert jnp.allclose(out, ref, atol=1e-5, rtol=1e-5), "mismatch (B=8, fallback)"

    # 2) Force the kernel on a moderate batch: single full-array block.
    B1 = 256
    x1 = jax.random.normal(k2, (B1, IN_FEATURES), dtype=jnp.float32)
    out1 = jax.block_until_ready(model_forward(x1, weight, min_kernel_rows=0))
    ref1 = x1 @ weight.T
    assert out1.shape == (B1, OUT_FEATURES), out1.shape
    assert jnp.allclose(out1, ref1, atol=1e-5, rtol=1e-5), "mismatch (B=256, kernel)"

    # 3) Large batch, evenly tiled: grid of 3 full (4096, 30) blocks.
    B2 = 12288
    x2 = jax.random.normal(k3, (B2, IN_FEATURES), dtype=jnp.float32)
    out2 = jax.block_until_ready(model_forward(x2, weight))
    ref2 = x2 @ weight.T
    assert out2.shape == (B2, OUT_FEATURES), out2.shape
    assert jnp.allclose(out2, ref2, atol=1e-4, rtol=1e-5), "mismatch (B=12288, kernel)"

    # 4) Large batch with a partial edge block (masked edge DMA/stores path).
    B3 = 10000
    x3 = jax.random.normal(k4, (B3, IN_FEATURES), dtype=jnp.float32)
    out3 = jax.block_until_ready(model_forward(x3, weight))
    ref3 = x3 @ weight.T
    assert out3.shape == (B3, OUT_FEATURES), out3.shape
    assert jnp.allclose(out3, ref3, atol=1e-4, rtol=1e-5), "mismatch (B=10000, kernel)"

    print("KERNEL_OK")
</pallas_src>

<mosaic_0001>
module attributes {stable_mosaic.version = 11 : i64} {
  func.func @linear_kernel(%arg0: i32, %arg1: memref<256x30xf32, #tpu.memory_space<vmem>>, %arg2: memref<1x30xf32, #tpu.memory_space<vmem>>, %arg3: memref<256x1xf32, #tpu.memory_space<vmem>>) attributes {dimension_semantics = [#tpu.dimension_semantics<parallel>], iteration_bounds = array<i64: 1>, scalar_prefetch = 0 : i64, scratch_operands = 0 : i64, tpu.core_type = #tpu.core_type<tc>, window_params = [{transform_indices = @transform_0, window_bounds = array<i64: 256, 30>}, {pipeline_mode = #tpu.pipeline_mode<synchronous>, transform_indices = @transform_1, window_bounds = array<i64: 1, 30>}, {transform_indices = @transform_2, window_bounds = array<i64: 256, 1>}]} {
    %c0 = arith.constant 0 : index
    %c0_0 = arith.constant 0 : index
    %0 = vector.load %arg1[%c0, %c0_0] : memref<256x30xf32, #tpu.memory_space<vmem>>, vector<256x30xf32>
    %c0_1 = arith.constant 0 : index
    %c0_2 = arith.constant 0 : index
    %1 = vector.load %arg2[%c0_1, %c0_2] : memref<1x30xf32, #tpu.memory_space<vmem>>, vector<1x30xf32>
    %2 = vector.broadcast %1 : vector<1x30xf32> to vector<256x30xf32>
    %3 = arith.mulf %0, %2 : vector<256x30xf32>
    %cst = arith.constant dense<0.000000e+00> : vector<256xf32>
    %4 = vector.multi_reduction <add>, %3, %cst [1] : vector<256x30xf32> to vector<256xf32>
    %5 = vector.shape_cast %4 : vector<256xf32> to vector<256x1xf32>
    %c0_3 = arith.constant 0 : index
    %c0_4 = arith.constant 0 : index
    %6 = vector.load %arg3[%c0_3, %c0_4] : memref<256x1xf32, #tpu.memory_space<vmem>>, vector<256x1xf32>
    tpu.vector_store %arg3[%c0_3, %c0_4], %5 {strides = array<i32>} : memref<256x1xf32, #tpu.memory_space<vmem>>, vector<256x1xf32>,
    return
  }
  func.func @transform_0(%arg0: i32) -> (i32, i32) {
    %c0_i32 = arith.constant 0 : i32
    %c0_i32_0 = arith.constant 0 : i32
    return %arg0, %c0_i32 : i32, i32
  }
  func.func @transform_1(%arg0: i32) -> (i32, i32) {
    %c0_i32 = arith.constant 0 : i32
    %c0_i32_0 = arith.constant 0 : i32
    %c0_i32_1 = arith.constant 0 : i32
    return %c0_i32, %c0_i32_0 : i32, i32
  }
  func.func @transform_2(%arg0: i32) -> (i32, i32) {
    %c0_i32 = arith.constant 0 : i32
    %c0_i32_0 = arith.constant 0 : i32
    return %arg0, %c0_i32 : i32, i32
  }
}

</mosaic_0001>

<llo_original>
// kernel: tpu_custom_call.1
$region0: #{tpu_custom_call.1}
  #allocation0 [shape = 'u32[]', space=smem, size = 0x4, offset = 0x4, fixed_abs, tag = 'smem constant byte address 0x4 - core index']
  #allocation1 [shape = 'u32[144,128]{1,0:T(1,128)}', space=vmem, size = 0x12000, scoped, tag = 'internal scratch']
  %s0 = inlined_call_operand.vmem [shape: f32[256,30], index: 0, kind: input, shape index: {}]
  %s1 = inlined_call_operand.vmem [shape: f32[1,30], index: 1, kind: input, shape index: {}]
  %s2 = inlined_call_operand.vmem [shape: f32[256,1], index: 2, kind: output, shape index: {}]
  %s3 = sld [smem:[#allocation0]]
  $region18: #{tpu_custom_call.1} parent=0
    _
  %s5 = ssub.s32 1, %s3
  %s6 = scalar_select 0, %s5, %s3
  // Predicated region
  $region2: #{tpu_custom_call.1} parent=0 // pred_check
    _
  $region3: #{tpu_custom_call.1} parent=0 // pred_check_branch
    %8 = sbr.rel (0) target = $region5
  $region4: #{tpu_custom_call.1} parent=0 // pred_region
    _
  $region5: #{tpu_custom_call.1} parent=0 // pred_fallthru
    _
  // Predicated region
  $region6: #{tpu_custom_call.1} parent=0 // pred_check
    _
  $region7: #{tpu_custom_call.1} parent=0 // pred_check_branch
    %10 = sbr.rel (0) target = $region9
  $region8: #{tpu_custom_call.1} parent=0 // pred_region
    _
  $region9: #{tpu_custom_call.1} parent=0 // pred_fallthru
    _
  %v11 = vld [vmem:[%s0] sm:$0xff]
  %v12 = vld [vmem:[%s0 + $0x8] sm:$0xff]
  %v13 = vld [vmem:[%s0 + $0x10] sm:$0xff]
  %v14 = vld [vmem:[%s0 + $0x18] sm:$0xff]
  %v15 = vld [vmem:[%s0 + $0x20] sm:$0xff]
  %v16 = vld [vmem:[%s0 + $0x28] sm:$0xff]
  %v17 = vld [vmem:[%s0 + $0x30] sm:$0xff]
  %v18 = vld [vmem:[%s0 + $0x38] sm:$0xff]
  %v19 = vld [vmem:[%s0 + $0x40] sm:$0xff]
  %v20 = vld [vmem:[%s0 + $0x48] sm:$0xff]
  %v21 = vld [vmem:[%s0 + $0x50] sm:$0xff]
  %v22 = vld [vmem:[%s0 + $0x58] sm:$0xff]
  %v23 = vld [vmem:[%s0 + $0x60] sm:$0xff]
  %v24 = vld [vmem:[%s0 + $0x68] sm:$0xff]
  %v25 = vld [vmem:[%s0 + $0x70] sm:$0xff]
  %v26 = vld [vmem:[%s0 + $0x78] sm:$0xff]
  %v27 = vld [vmem:[%s0 + $0x80] sm:$0xff]
  %v28 = vld [vmem:[%s0 + $0x88] sm:$0xff]
  %v29 = vld [vmem:[%s0 + $0x90] sm:$0xff]
  %v30 = vld [vmem:[%s0 + $0x98] sm:$0xff]
  %v31 = vld [vmem:[%s0 + $0xa0] sm:$0xff]
  %v32 = vld [vmem:[%s0 + $0xa8] sm:$0xff]
  %v33 = vld [vmem:[%s0 + $0xb0] sm:$0xff]
  %v34 = vld [vmem:[%s0 + $0xb8] sm:$0xff]
  %v35 = vld [vmem:[%s0 + $0xc0] sm:$0xff]
  %v36 = vld [vmem:[%s0 + $0xc8] sm:$0xff]
  %v37 = vld [vmem:[%s0 + $0xd0] sm:$0xff]
  %v38 = vld [vmem:[%s0 + $0xd8] sm:$0xff]
  %v39 = vld [vmem:[%s0 + $0xe0] sm:$0xff]
  %v40 = vld [vmem:[%s0 + $0xe8] sm:$0xff]
  %v41 = vld [vmem:[%s0 + $0xf0] sm:$0xff]
  %v42 = vld [vmem:[%s0 + $0xf8] sm:$0xff]
  %v43 = vld [vmem:[%s1] sm:$0x1]
  %v45 = vlaneseq
  %v46 = vshrl.u32 %v45, 7
  %v47 = vsub.s32 0, %v46
  %v48 = vrot.slane %v43, %v47
  %v50 = vmul.f32 %v11, %v48
  %v51 = vmul.f32 %v12, %v48
  %v52 = vmul.f32 %v13, %v48
  %v53 = vmul.f32 %v14, %v48
  %v54 = vmul.f32 %v15, %v48
  %v55 = vmul.f32 %v16, %v48
  %v56 = vmul.f32 %v17, %v48
  %v57 = vmul.f32 %v18, %v48
  %v58 = vmul.f32 %v19, %v48
  %v59 = vmul.f32 %v20, %v48
  %v60 = vmul.f32 %v21, %v48
  %v61 = vmul.f32 %v22, %v48
  %v62 = vmul.f32 %v23, %v48
  %v63 = vmul.f32 %v24, %v48
  %v64 = vmul.f32 %v25, %v48
  %v65 = vmul.f32 %v26, %v48
  %v66 = vmul.f32 %v27, %v48
  %v67 = vmul.f32 %v28, %v48
  %v68 = vmul.f32 %v29, %v48
  %v69 = vmul.f32 %v30, %v48
  %v70 = vmul.f32 %v31, %v48
  %v71 = vmul.f32 %v32, %v48
  %v72 = vmul.f32 %v33, %v48
  %v73 = vmul.f32 %v34, %v48
  %v74 = vmul.f32 %v35, %v48
  %v75 = vmul.f32 %v36, %v48
  %v76 = vmul.f32 %v37, %v48
  %v77 = vmul.f32 %v38, %v48
  %v78 = vmul.f32 %v39, %v48
  %v79 = vmul.f32 %v40, %v48
  %v80 = vmul.f32 %v41, %v48
  %v81 = vmul.f32 %v42, %v48
  %vm82 = vcmask 244736
  %v83 = vsel %vm82, %v50, 0.0
  %84 = vadd.xlane.f32.xlu0 %v83
  %v85 = vpop.xlane.xlu0 %84
  %v86 = vsel %vm82, %v51, 0.0
  %87 = vadd.xlane.f32.xlu0 %v86
  %v88 = vpop.xlane.xlu0 %87
  %v89 = vsel %vm82, %v52, 0.0
  %90 = vadd.xlane.f32.xlu0 %v89
  %v91 = vpop.xlane.xlu0 %90
  %v92 = vsel %vm82, %v53, 0.0
  %93 = vadd.xlane.f32.xlu0 %v92
  %v94 = vpop.xlane.xlu0 %93
  %v95 = vsel %vm82, %v54, 0.0
  %96 = vadd.xlane.f32.xlu0 %v95
  %v97 = vpop.xlane.xlu0 %96
  %v98 = vsel %vm82, %v55, 0.0
  %99 = vadd.xlane.f32.xlu0 %v98
  %v100 = vpop.xlane.xlu0 %99
  %v101 = vsel %vm82, %v56, 0.0
  %102 = vadd.xlane.f32.xlu0 %v101
  %v103 = vpop.xlane.xlu0 %102
  %v104 = vsel %vm82, %v57, 0.0
  %105 = vadd.xlane.f32.xlu0 %v104
  %v106 = vpop.xlane.xlu0 %105
  %v107 = vsel %vm82, %v58, 0.0
  %108 = vadd.xlane.f32.xlu0 %v107
  %v109 = vpop.xlane.xlu0 %108
  %v110 = vsel %vm82, %v59, 0.0
  %111 = vadd.xlane.f32.xlu0 %v110
  %v112 = vpop.xlane.xlu0 %111
  %v113 = vsel %vm82, %v60, 0.0
  %114 = vadd.xlane.f32.xlu0 %v113
  %v115 = vpop.xlane.xlu0 %114
  %v116 = vsel %vm82, %v61, 0.0
  %117 = vadd.xlane.f32.xlu0 %v116
  %v118 = vpop.xlane.xlu0 %117
  %v119 = vsel %vm82, %v62, 0.0
  %120 = vadd.xlane.f32.xlu0 %v119
  %v121 = vpop.xlane.xlu0 %120
  %v122 = vsel %vm82, %v63, 0.0
  %123 = vadd.xlane.f32.xlu0 %v122
  %v124 = vpop.xlane.xlu0 %123
  %v125 = vsel %vm82, %v64, 0.0
  %126 = vadd.xlane.f32.xlu0 %v125
  %v127 = vpop.xlane.xlu0 %126
  %v128 = vsel %vm82, %v65, 0.0
  %129 = vadd.xlane.f32.xlu0 %v128
  %v130 = vpop.xlane.xlu0 %129
  %v131 = vsel %vm82, %v66, 0.0
  %132 = vadd.xlane.f32.xlu0 %v131
  %v133 = vpop.xlane.xlu0 %132
  %v134 = vsel %vm82, %v67, 0.0
  %135 = vadd.xlane.f32.xlu0 %v134
  %v136 = vpop.xlane.xlu0 %135
  %v137 = vsel %vm82, %v68, 0.0
  %138 = vadd.xlane.f32.xlu0 %v137
  %v139 = vpop.xlane.xlu0 %138
  %v140 = vsel %vm82, %v69, 0.0
  %141 = vadd.xlane.f32.xlu0 %v140
  %v142 = vpop.xlane.xlu0 %141
  %v143 = vsel %vm82, %v70, 0.0
  %144 = vadd.xlane.f32.xlu0 %v143
  %v145 = vpop.xlane.xlu0 %144
  %v146 = vsel %vm82, %v71, 0.0
  %147 = vadd.xlane.f32.xlu0 %v146
  %v148 = vpop.xlane.xlu0 %147
  %v149 = vsel %vm82, %v72, 0.0
  %150 = vadd.xlane.f32.xlu0 %v149
  %v151 = vpop.xlane.xlu0 %150
  %v152 = vsel %vm82, %v73, 0.0
  %153 = vadd.xlane.f32.xlu0 %v152
  %v154 = vpop.xlane.xlu0 %153
  %v155 = vsel %vm82, %v74, 0.0
  %156 = vadd.xlane.f32.xlu0 %v155
  %v157 = vpop.xlane.xlu0 %156
  %v158 = vsel %vm82, %v75, 0.0
  %159 = vadd.xlane.f32.xlu0 %v158
  %v160 = vpop.xlane.xlu0 %159
  %v161 = vsel %vm82, %v76, 0.0
  %162 = vadd.xlane.f32.xlu0 %v161
  %v163 = vpop.xlane.xlu0 %162
  %v164 = vsel %vm82, %v77, 0.0
  %165 = vadd.xlane.f32.xlu0 %v164
  %v166 = vpop.xlane.xlu0 %165
  %v167 = vsel %vm82, %v78, 0.0
  %168 = vadd.xlane.f32.xlu0 %v167
  %v169 = vpop.xlane.xlu0 %168
  %v170 = vsel %vm82, %v79, 0.0
  %171 = vadd.xlane.f32.xlu0 %v170
  %v172 = vpop.xlane.xlu0 %171
  %v173 = vsel %vm82, %v80, 0.0
  %174 = vadd.xlane.f32.xlu0 %v173
  %v175 = vpop.xlane.xlu0 %174
  %v176 = vsel %vm82, %v81, 0.0
  %177 = vadd.xlane.f32.xlu0 %v176
  %v178 = vpop.xlane.xlu0 %177
  %vm179 = vcmask 7168
  %180 = vst.msk [vmem:[%s2] sm:$0xff] %vm179, %v85
  %181 = vst.msk [vmem:[%s2 + $0x8] sm:$0xff] %vm179, %v88
  %182 = vst.msk [vmem:[%s2 + $0x10] sm:$0xff] %vm179, %v91
  %183 = vst.msk [vmem:[%s2 + $0x18] sm:$0xff] %vm179, %v94
  %184 = vst.msk [vmem:[%s2 + $0x20] sm:$0xff] %vm179, %v97
  %185 = vst.msk [vmem:[%s2 + $0x28] sm:$0xff] %vm179, %v100
  %186 = vst.msk [vmem:[%s2 + $0x30] sm:$0xff] %vm179, %v103
  %187 = vst.msk [vmem:[%s2 + $0x38] sm:$0xff] %vm179, %v106
  %188 = vst.msk [vmem:[%s2 + $0x40] sm:$0xff] %vm179, %v109
  %189 = vst.msk [vmem:[%s2 + $0x48] sm:$0xff] %vm179, %v112
  %190 = vst.msk [vmem:[%s2 + $0x50] sm:$0xff] %vm179, %v115
  %191 = vst.msk [vmem:[%s2 + $0x58] sm:$0xff] %vm179, %v118
  %192 = vst.msk [vmem:[%s2 + $0x60] sm:$0xff] %vm179, %v121
  %193 = vst.msk [vmem:[%s2 + $0x68] sm:$0xff] %vm179, %v124
  %194 = vst.msk [vmem:[%s2 + $0x70] sm:$0xff] %vm179, %v127
  %195 = vst.msk [vmem:[%s2 + $0x78] sm:$0xff] %vm179, %v130
  %196 = vst.msk [vmem:[%s2 + $0x80] sm:$0xff] %vm179, %v133
  %197 = vst.msk [vmem:[%s2 + $0x88] sm:$0xff] %vm179, %v136
  %198 = vst.msk [vmem:[%s2 + $0x90] sm:$0xff] %vm179, %v139
  %199 = vst.msk [vmem:[%s2 + $0x98] sm:$0xff] %vm179, %v142
  %200 = vst.msk [vmem:[%s2 + $0xa0] sm:$0xff] %vm179, %v145
  %201 = vst.msk [vmem:[%s2 + $0xa8] sm:$0xff] %vm179, %v148
  %202 = vst.msk [vmem:[%s2 + $0xb0] sm:$0xff] %vm179, %v151
  %203 = vst.msk [vmem:[%s2 + $0xb8] sm:$0xff] %vm179, %v154
  %204 = vst.msk [vmem:[%s2 + $0xc0] sm:$0xff] %vm179, %v157
  %205 = vst.msk [vmem:[%s2 + $0xc8] sm:$0xff] %vm179, %v160
  %206 = vst.msk [vmem:[%s2 + $0xd0] sm:$0xff] %vm179, %v163
  %207 = vst.msk [vmem:[%s2 + $0xd8] sm:$0xff] %vm179, %v166
  %208 = vst.msk [vmem:[%s2 + $0xe0] sm:$0xff] %vm179, %v169
  %209 = vst.msk [vmem:[%s2 + $0xe8] sm:$0xff] %vm179, %v172
  %210 = vst.msk [vmem:[%s2 + $0xf0] sm:$0xff] %vm179, %v175
  %211 = vst.msk [vmem:[%s2 + $0xf8] sm:$0xff] %vm179, %v178
  // Predicated region
  $region10: #{tpu_custom_call.1} parent=0 // pred_check
    _
  $region11: #{tpu_custom_call.1} parent=0 // pred_check_branch
    %213 = sbr.rel (0) target = $region13
  $region12: #{tpu_custom_call.1} parent=0 // pred_region
    _
  $region13: #{tpu_custom_call.1} parent=0 // pred_fallthru
    _
  // Predicated region
  $region14: #{tpu_custom_call.1} parent=0 // pred_check
    _
  $region15: #{tpu_custom_call.1} parent=0 // pred_check_branch
    %215 = sbr.rel (0) target = $region17
  $region16: #{tpu_custom_call.1} parent=0 // pred_region
    _
  $region17: #{tpu_custom_call.1} parent=0 // pred_fallthru
    _

</llo_original>
